<compile_context>
chip_gen: v6e
topology: v6e:2x2x1
jax: 0.10.0
libtpu: 0.0.40
codegen_flags: <defaults>
</compile_context>

<pallas_src>
import functools
import math

import jax
import jax.numpy as jnp
from jax.experimental import pallas as pl
from jax.experimental.pallas import tpu as pltpu


_PARALLEL_1D = pltpu.CompilerParams(dimension_semantics=("parallel",))
_ROW_CAP = 1024


def _row_tile(m):
    """Largest row tile <= cap; prefer >= 2 grid steps (both v7x TensorCores)."""
    if m > _ROW_CAP:
        return _ROW_CAP
    if m >= 16 and m % 16 == 0:
        return m // 2
    return m


# --------------------------------------------------------------------------
# Simple fused kernels (encoder stub projection, output head)
# --------------------------------------------------------------------------
def _linear_kernel(x_ref, w_ref, b_ref, o_ref):
    o_ref[...] = (
        jnp.dot(x_ref[...].astype(jnp.bfloat16), w_ref[...],
                preferred_element_type=jnp.float32)
        + b_ref[...]
    )


def linear(x, w, b):
    """x: [M, K] @ w: [K, N] + b: [N] -> [M, N]."""
    M, K = x.shape
    N = w.shape[1]
    tm = _row_tile(M)
    return pl.pallas_call(
        _linear_kernel,
        out_shape=jax.ShapeDtypeStruct((M, N), jnp.float32),
        grid=(pl.cdiv(M, tm),),
        in_specs=[
            pl.BlockSpec((tm, K), lambda i: (i, 0)),
            pl.BlockSpec((K, N), lambda i: (0, 0)),
            pl.BlockSpec((1, N), lambda i: (0, 0)),
        ],
        out_specs=pl.BlockSpec((tm, N), lambda i: (i, 0)),
        compiler_params=_PARALLEL_1D,
    )(x, w.astype(jnp.bfloat16), b.reshape(1, N))


def _head_kernel(x_ref, g_ref, bt_ref, w1_ref, b1_ref, w2_ref, b2_ref, o_ref, *, eps):
    x = x_ref[...]
    mu = jnp.mean(x, axis=-1, keepdims=True)
    xc = x - mu
    var = jnp.mean(xc * xc, axis=-1, keepdims=True)
    xn = xc * jax.lax.rsqrt(var + eps) * g_ref[...] + bt_ref[...]
    h = jnp.tanh(
        jnp.dot(xn.astype(jnp.bfloat16), w1_ref[...],
                preferred_element_type=jnp.float32) + b1_ref[...])
    o_ref[...] = (
        jnp.dot(h.astype(jnp.bfloat16), w2_ref[...],
                preferred_element_type=jnp.float32) + b2_ref[...])


def head(x, g, bt, w1, b1, w2, b2, eps=1e-5):
    """LayerNorm -> Linear -> Tanh -> Linear (nn.Sequential head), fused."""
    M, C = x.shape
    Ch = w1.shape[1]
    No = w2.shape[1]
    tm = _row_tile(M)
    return pl.pallas_call(
        functools.partial(_head_kernel, eps=eps),
        out_shape=jax.ShapeDtypeStruct((M, No), jnp.float32),
        grid=(pl.cdiv(M, tm),),
        in_specs=[
            pl.BlockSpec((tm, C), lambda i: (i, 0)),
            pl.BlockSpec((1, C), lambda i: (0, 0)),
            pl.BlockSpec((1, C), lambda i: (0, 0)),
            pl.BlockSpec((C, Ch), lambda i: (0, 0)),
            pl.BlockSpec((1, Ch), lambda i: (0, 0)),
            pl.BlockSpec((Ch, No), lambda i: (0, 0)),
            pl.BlockSpec((1, No), lambda i: (0, 0)),
        ],
        out_specs=pl.BlockSpec((tm, No), lambda i: (i, 0)),
        compiler_params=_PARALLEL_1D,
    )(x, g.reshape(1, C), bt.reshape(1, C),
      w1.astype(jnp.bfloat16), b1.reshape(1, Ch),
      w2.astype(jnp.bfloat16), b2.reshape(1, No))


# --------------------------------------------------------------------------
# Fused per-level: (backbone-lift ∘ feat_emb) 1x1 conv + bilinear grid-sample
# --------------------------------------------------------------------------
def _sample_level_kernel(feat_ref, gx_ref, gy_ref, w_ref, b_ref, o_ref, *, H, W):
    # feat_ref: [1, H*W, Cin] (bf16); fused 1x1 conv, bf16 MXU / f32 accumulate.
    fmap = (
        jnp.dot(feat_ref[0], w_ref[...], preferred_element_type=jnp.float32)
        + b_ref[...]
    )                                                        # [H*W, C] f32
    # unnormalize (align_corners=True);   gx -> width (W), gy -> height (H)
    gx = (gx_ref[0] + 1.0) * (0.5 * (W - 1))                 # [Q, 1]
    gy = (gy_ref[0] + 1.0) * (0.5 * (H - 1))                 # [Q, 1]
    # Integer row/col maps via in-kernel iota (no HBM inputs for them).
    pix = jax.lax.broadcasted_iota(jnp.int32, (1, H * W), 1)
    row_f = (pix // W).astype(jnp.float32)                   # [1, H*W]
    col_f = (pix % W).astype(jnp.float32)                    # [1, H*W]
    # Separable bilinear "tent" weights; exactly equal to 4-corner bilinear
    # with padding_mode='zeros' (weights vanish > 1 pixel away / OOB).
    wy = jnp.maximum(1.0 - jnp.abs(gy - row_f), 0.0)         # [Q, H*W]
    wx = jnp.maximum(1.0 - jnp.abs(gx - col_f), 0.0)         # [Q, H*W]
    tent = (wy * wx).astype(jnp.bfloat16)
    o_ref[0] = jnp.dot(tent, fmap.astype(jnp.bfloat16),
                       preferred_element_type=jnp.float32)   # [Q, C]


def sample_level(feat_nhwc, gx, gy, w, bvec):
    """feat_nhwc: [B, H, W, Cin]; gx/gy: [B, Q] in [-1, 1]; w: [Cin, C] -> [B, Q, C].

    Implements F.grid_sample(conv1x1(feat), grid, mode='bilinear',
    padding='zeros', align_corners=True) with the 1x1 conv fused in.
    TODO(synk): at production feature-map sizes (e.g. 96x72) tile the H*W axis
    with an extra 'arbitrary' grid axis (or raise vmem_limit_bytes) for v7x's
    smaller VMEM.
    """
    B, H, W, Cin = feat_nhwc.shape
    Q = gx.shape[1]
    C = w.shape[1]
    feat_flat = feat_nhwc.reshape(B, H * W, Cin).astype(jnp.bfloat16)
    return pl.pallas_call(
        functools.partial(_sample_level_kernel, H=H, W=W),
        out_shape=jax.ShapeDtypeStruct((B, Q, C), jnp.float32),
        grid=(B,),
        in_specs=[
            pl.BlockSpec((1, H * W, Cin), lambda i: (i, 0, 0)),
            pl.BlockSpec((1, Q, 1), lambda i: (i, 0, 0)),
            pl.BlockSpec((1, Q, 1), lambda i: (i, 0, 0)),
            pl.BlockSpec((Cin, C), lambda i: (0, 0)),
            pl.BlockSpec((1, C), lambda i: (0, 0)),
        ],
        out_specs=pl.BlockSpec((1, Q, C), lambda i: (i, 0, 0)),
        compiler_params=_PARALLEL_1D,
    )(feat_flat, gx.reshape(B, Q, 1), gy.reshape(B, Q, 1),
      w.astype(jnp.bfloat16), bvec.reshape(1, C))


# --------------------------------------------------------------------------
# Fused decoder stack: ALL layers (norm_2 -> MHA -> res -> norm_3 -> MLP -> res)
# in one pallas_call; activations resident in VMEM across the layer grid axis.
# --------------------------------------------------------------------------
def _decoder_stack_kernel(x_ref, n2g_ref, n2b_ref,
                          wq_ref, bq_ref, wk_ref, bk_ref, wv_ref, bv_ref,
                          wo_ref, bo_ref,
                          n3g_ref, n3b_ref, w1_ref, b1_ref, w2_ref, b2_ref,
                          o_ref, *, n_heads, S, eps):
    layer = pl.program_id(1)

    @pl.when(layer == 0)
    def _():                                  # bring activations into residence
        o_ref[...] = x_ref[...]

    x = o_ref[...]                            # [M, C] f32, M = bt_blk * S
    M = x.shape[0]
    bf = jnp.bfloat16

    def ln(v, g, b):
        mu = jnp.mean(v, axis=-1, keepdims=True)
        vc = v - mu
        var = jnp.mean(vc * vc, axis=-1, keepdims=True)
        return vc * jax.lax.rsqrt(var + eps) * g + b

    # Block-diagonal mask: each (b,t) token attends only within its own S rows.
    tok_r = jax.lax.broadcasted_iota(jnp.int32, (M, M), 0) // S
    tok_c = jax.lax.broadcasted_iota(jnp.int32, (M, M), 1) // S
    same_tok = tok_r == tok_c

    # ---- cross-attention branch: norm_2 -> MHA(q=k=v) -> residual ----
    y = ln(x, n2g_ref[0], n2b_ref[0])
    yb = y.astype(bf)
    attn = jnp.zeros_like(x)
    for h in range(n_heads):                  # per-head weights pre-split: no lane slicing
        q = jnp.dot(yb, wq_ref[0, h], preferred_element_type=jnp.float32) + bq_ref[0, h]
        k = jnp.dot(yb, wk_ref[0, h], preferred_element_type=jnp.float32) + bk_ref[0, h]
        v = jnp.dot(yb, wv_ref[0, h], preferred_element_type=jnp.float32) + bv_ref[0, h]
        # scores over the whole M slab, masked block-diagonal (1/sqrt(dh) folded into wq/bq)
        s = jax.lax.dot_general(q.astype(bf), k.astype(bf),
                                (((1,), (1,)), ((), ())),
                                preferred_element_type=jnp.float32)   # [M, M]
        s = jnp.where(same_tok, s, -1e30)
        s = s - jnp.max(s, axis=-1, keepdims=True)
        p = jnp.exp(s)
        p = p * pl.reciprocal(jnp.sum(p, axis=-1, keepdims=True), approx=True)
        pv = jnp.dot(p.astype(bf), v.astype(bf),
                     preferred_element_type=jnp.float32)              # [M, dh]
        attn = attn + jnp.dot(pv.astype(bf), wo_ref[0, h],
                              preferred_element_type=jnp.float32)     # [M, C]
    x = x + attn + bo_ref[0]

    # ---- MLP branch: norm_3 -> Linear -> GELU -> Linear -> residual ----
    y = ln(x, n3g_ref[0], n3b_ref[0])
    h1 = jnp.dot(y.astype(bf), w1_ref[0], preferred_element_type=jnp.float32) + b1_ref[0]
    h1 = jax.nn.gelu(h1, approximate=False)   # exact (erf) GELU, matching nn.GELU()
    x = x + jnp.dot(h1.astype(bf), w2_ref[0],
                    preferred_element_type=jnp.float32) + b2_ref[0]

    o_ref[...] = x


def _choose_bt_blk(BT, S):
    def ok(blk):
        return BT % blk == 0 and ((blk * S) % 8 == 0 or blk == BT)
    for blk in (8, 4, 2):                      # prefer >= 4 parallel steps (v7x: 2 TCs)
        if ok(blk) and BT // blk >= 4:
            return blk
    for blk in (8, 4, 2, 1):
        if ok(blk):
            return blk
    return BT


def decoder_stack(x, layers, n_heads):
    """All MotionAGTransformerDecoderLayer (inference) layers, ONE pallas_call.

    x: [BT, S, C] with BT = b*t, S = num_joints*(n_levels+1).
    TODO(synk): MSDeformAttn-based self-attention branch (subforward_self, incl.
                PositionalEncoding / norm_1) skipped: class definition not provided.
    """
    BT, S, C = x.shape
    L = len(layers)
    dh = C // n_heads
    scale = 1.0 / math.sqrt(dh)
    Ch = layers[0]["mlp_w1"].shape[1]
    bt_blk = _choose_bt_blk(BT, S)
    M = bt_blk * S
    bf = jnp.bfloat16

    def stk(fn):
        return jnp.stack([fn(lp) for lp in layers], axis=0)

    # Per-head pre-split projections (scale folded into q), bf16 weights.
    wq = stk(lambda lp: (lp["attn_wqkv"][:, 0 * C:1 * C] * scale)
             .reshape(C, n_heads, dh).transpose(1, 0, 2)).astype(bf)
    wk = stk(lambda lp: lp["attn_wqkv"][:, 1 * C:2 * C]
             .reshape(C, n_heads, dh).transpose(1, 0, 2)).astype(bf)
    wv = stk(lambda lp: lp["attn_wqkv"][:, 2 * C:3 * C]
             .reshape(C, n_heads, dh).transpose(1, 0, 2)).astype(bf)
    bq = stk(lambda lp: (lp["attn_bqkv"][0 * C:1 * C] * scale).reshape(n_heads, 1, dh))
    bk = stk(lambda lp: lp["attn_bqkv"][1 * C:2 * C].reshape(n_heads, 1, dh))
    bv = stk(lambda lp: lp["attn_bqkv"][2 * C:3 * C].reshape(n_heads, 1, dh))
    wo = stk(lambda lp: lp["attn_wo"].reshape(n_heads, dh, C)).astype(bf)
    bo = stk(lambda lp: lp["attn_bo"].reshape(1, C))
    n2g = stk(lambda lp: lp["norm2_g"].reshape(1, C))
    n2b = stk(lambda lp: lp["norm2_b"].reshape(1, C))
    n3g = stk(lambda lp: lp["norm3_g"].reshape(1, C))
    n3b = stk(lambda lp: lp["norm3_b"].reshape(1, C))
    w1 = stk(lambda lp: lp["mlp_w1"]).astype(bf)
    b1 = stk(lambda lp: lp["mlp_b1"].reshape(1, Ch))
    w2 = stk(lambda lp: lp["mlp_w2"]).astype(bf)
    b2 = stk(lambda lp: lp["mlp_b2"].reshape(1, C))

    x2 = x.reshape(BT * S, C)

    def lw(shape):  # layer-indexed (stacked) weight BlockSpec
        nd = len(shape)
        return pl.BlockSpec((1,) + shape, lambda i, l, _nd=nd: (l,) + (0,) * _nd)

    out = pl.pallas_call(
        functools.partial(_decoder_stack_kernel, n_heads=n_heads, S=S, eps=1e-5),
        out_shape=jax.ShapeDtypeStruct((BT * S, C), jnp.float32),
        grid=(BT // bt_blk, L),
        in_specs=[
            pl.BlockSpec((M, C), lambda i, l: (i, 0)),
            lw((1, C)), lw((1, C)),                          # norm_2 gamma / beta
            lw((n_heads, C, dh)), lw((n_heads, 1, dh)),      # q proj (scaled)
            lw((n_heads, C, dh)), lw((n_heads, 1, dh)),      # k proj
            lw((n_heads, C, dh)), lw((n_heads, 1, dh)),      # v proj
            lw((n_heads, dh, C)), lw((1, C)),                # out proj
            lw((1, C)), lw((1, C)),                          # norm_3 gamma / beta
            lw((C, Ch)), lw((1, Ch)),                        # mlp fc1
            lw((Ch, C)), lw((1, C)),                         # mlp fc2
        ],
        out_specs=pl.BlockSpec((M, C), lambda i, l: (i, 0)),  # resident across layers
        compiler_params=pltpu.CompilerParams(
            dimension_semantics=("parallel", "arbitrary")),
    )(x2, n2g, n2b, wq, bq, wk, bk, wv, bv, wo, bo,
      n3g, n3b, w1, b1, w2, b2)
    return out.reshape(BT, S, C)


# --------------------------------------------------------------------------
# Forward pass
# --------------------------------------------------------------------------
def adaptive_pose_pooling_forward(params, images, poses_2d, poses_2d_crop, cfg):
    b, t2, _, H_img, W_img = images.shape
    _, t1, pj, _ = poses_2d_crop.shape
    t3 = t1 // t2
    c = cfg["dim_img"]
    n_levels = cfg["n_levels"]

    # ---------------- encoder stub + self.proj (composed into one matmul) ----------
    # TODO(synk): MotionAGTransformerEncoder not provided (external, loads checkpoint);
    #             stand-in deterministic linear embedding, composed exactly with proj.
    w_ep = params["enc_w"] @ params["proj_w"]
    b_ep = params["enc_b"] @ params["proj_w"] + params["proj_b"]
    enc = linear(poses_2d.reshape(-1, poses_2d.shape[-1]), w_ep, b_ep)
    enc = enc.reshape(b, t1, pj, c)

    # ---------------- per-level: backbone stand-in + fused conv + grid-sample ------
    imgs = images.reshape(b * t2, 3, H_img, W_img).transpose(0, 2, 3, 1)   # NCHW -> NHWC
    # normalized sampling grid: ref_poses / [W//2, H//2] - 1, regrouped per image frame
    rp = poses_2d_crop / jnp.array([W_img // 2, H_img // 2], jnp.float32) - 1.0
    rp = rp.reshape(b, t2, t3, pj, 2).reshape(b * t2, t3 * pj, 2)
    gx, gy = rp[..., 0], rp[..., 1]                           # lane-dense [B, Q] each

    levels = []
    for i, (hl, wl) in enumerate(cfg["level_shapes"]):
        # TODO(synk): HRNet backbone not provided (external, loads checkpoint);
        #             stand-in = bilinear resize + channel-lift linear per level.
        f = jax.image.resize(imgs, (b * t2, hl, wl, 3), method="linear")
        # exact algebraic fusion of (backbone-lift linear) and (feat_emb 1x1 conv)
        w_lvl = params["bb_w"][i] @ params["emb_w"][i]
        b_lvl = params["bb_b"][i] @ params["emb_w"][i] + params["emb_b"][i]
        s = sample_level(f, gx, gy, w_lvl, b_lvl)              # [(b t2), t3*pj, c]
        s = s.reshape(b, t2, t3, pj, c).reshape(b, t1, pj, c)  # '(b t2) c t3 p -> b (t2 t3) p c'
        levels.append(s)

    x = jnp.stack([enc] + levels, axis=-2)                     # [b, t1, pj, n_levels+1, c]

    # ---------------- decoder: all layers in ONE fused pallas_call -----------------
    xt = x.reshape(b * t1, pj * (n_levels + 1), c)
    xt = decoder_stack(xt, params["layers"], cfg["n_heads"])
    x = xt.reshape(b, t1, pj, (n_levels + 1) * c)              # 'b t p l c -> b t p (l c)'

    # ---------------- head (fused LN -> Linear -> Tanh -> Linear) ------------------
    out = head(
        x.reshape(-1, (n_levels + 1) * c),
        params["head_g"], params["head_b"],
        params["head_w1"], params["head_b1"],
        params["head_w2"], params["head_b2"],
    )
    return out.reshape(b, t1, pj, -1)


# --------------------------------------------------------------------------
# Deterministic parameter initialization (synthetic; no checkpoint loading)
# --------------------------------------------------------------------------
def init_params(key, cfg):
    c = cfg["dim_img"]
    feats = cfg["backbone_feats"]
    n_levels = cfg["n_levels"]
    dim_feat = cfg["enc_dim_feat"]
    hidden = int(c * cfg["mlp_ratio"])
    keys = iter(jax.random.split(key, 64))

    def w(shape, scale=0.02):
        return (scale * jax.random.normal(next(keys), shape)).astype(jnp.float32)

    def zeros(shape):
        return jnp.zeros(shape, jnp.float32)

    def ones(shape):
        return jnp.ones(shape, jnp.float32)

    params = {
        "enc_w": w((3, dim_feat)), "enc_b": zeros((dim_feat,)),
        "proj_w": w((dim_feat, c)), "proj_b": zeros((c,)),
        "bb_w": [w((3, f)) for f in feats], "bb_b": [zeros((f,)) for f in feats],
        "emb_w": [w((f, c)) for f in feats], "emb_b": [zeros((c,)) for f in feats],
        "layers": [],
        "head_g": ones(((n_levels + 1) * c,)), "head_b": zeros(((n_levels + 1) * c,)),
        "head_w1": w(((n_levels + 1) * c, c)), "head_b1": zeros((c,)),
        "head_w2": w((c, cfg["dim_out"])), "head_b2": zeros((cfg["dim_out"],)),
    }
    # NOTE: synthetic weights stored as [in, out]; real nn.MultiheadAttention
    # checkpoints store in_proj_weight as [3C, C] and must be transposed on import.
    for _ in range(cfg["n_layers"]):
        params["layers"].append({
            "norm2_g": ones((c,)), "norm2_b": zeros((c,)),
            "norm3_g": ones((c,)), "norm3_b": zeros((c,)),
            "attn_wqkv": w((c, 3 * c)), "attn_bqkv": zeros((3 * c,)),
            "attn_wo": w((c, c)), "attn_bo": zeros((c,)),
            "mlp_w1": w((c, hidden)), "mlp_b1": zeros((hidden,)),
            "mlp_w2": w((hidden, c)), "mlp_b2": zeros((c,)),
        })
    return params


# --------------------------------------------------------------------------
if __name__ == "__main__":
    cfg = dict(
        dim_img=32,              # dec_dim_img (small)
        n_heads=4,               # dec_n_heads (small)
        n_levels=4,              # dec_n_levels (kept: 4 backbone scales)
        n_layers=2,              # dec_n_layers (small)
        mlp_ratio=4.0,
        enc_dim_feat=32,         # enc_dim_feat (small)
        dim_out=3,               # enc_dim_out
        backbone_feats=[8, 16, 32, 64],
        level_shapes=[(16, 12), (8, 6), (4, 3), (2, 2)],
    )
    b, t2, t3, pj = 2, 2, 4, 4   # batch, image frames, frames-per-image, joints
    t1 = t2 * t3                 # pose frames
    H_img, W_img = 32, 24        # crop size (small stand-in for 384x288)

    key = jax.random.PRNGKey(0)
    k1, k2, k3, k4 = jax.random.split(key, 4)
    params = init_params(k1, cfg)

    images = jax.random.normal(k2, (b, t2, 3, H_img, W_img), jnp.float32)     # NCHW
    poses_2d = jax.random.normal(k3, (b, t1, pj, 3), jnp.float32)
    poses_2d_crop = (
        jax.random.uniform(k4, (b, t1, pj, 2), jnp.float32)
        * jnp.array([W_img, H_img], jnp.float32)
    )

    out = adaptive_pose_pooling_forward(params, images, poses_2d, poses_2d_crop, cfg)
    out = jax.block_until_ready(out)
    assert out.shape == (b, t1, pj, 3) and out.dtype == jnp.float32
    print("KERNEL_OK")
</pallas_src>

<mosaic_0001>
module attributes {stable_mosaic.version = 11 : i64} {
  func.func @_linear_kernel(%arg0: i32, %arg1: memref<32x3xf32, #tpu.memory_space<vmem>>, %arg2: memref<3x32xbf16, #tpu.memory_space<vmem>>, %arg3: memref<1x32xf32, #tpu.memory_space<vmem>>, %arg4: memref<32x32xf32, #tpu.memory_space<vmem>>) attributes {dimension_semantics = [#tpu.dimension_semantics<parallel>], iteration_bounds = array<i64: 2>, scalar_prefetch = 0 : i64, scratch_operands = 0 : i64, tpu.core_type = #tpu.core_type<tc>, window_params = [{transform_indices = @transform_0, window_bounds = array<i64: 32, 3>}, {pipeline_mode = #tpu.pipeline_mode<synchronous>, transform_indices = @transform_1, window_bounds = array<i64: 3, 32>}, {pipeline_mode = #tpu.pipeline_mode<synchronous>, transform_indices = @transform_2, window_bounds = array<i64: 1, 32>}, {transform_indices = @transform_3, window_bounds = array<i64: 32, 32>}]} {
    %c0 = arith.constant 0 : index
    %c0_0 = arith.constant 0 : index
    %0 = vector.load %arg1[%c0, %c0_0] : memref<32x3xf32, #tpu.memory_space<vmem>>, vector<32x3xf32>
    %1 = arith.truncf %0 : vector<32x3xf32> to vector<32x3xbf16>
    %c0_1 = arith.constant 0 : index
    %c0_2 = arith.constant 0 : index
    %2 = vector.load %arg2[%c0_1, %c0_2] : memref<3x32xbf16, #tpu.memory_space<vmem>>, vector<3x32xbf16>
    %cst = arith.constant dense<0.000000e+00> : vector<32x32xf32>
    %3 = tpu.matmul %1, %2, %cst {dimension_numbers = #tpu.dot_dimension_numbers<[1], [0], [0], [1], [0, 0, 1, 1], [], []>} : vector<32x3xbf16>, vector<3x32xbf16>, vector<32x32xf32> -> vector<32x32xf32>
    %c0_3 = arith.constant 0 : index
    %c0_4 = arith.constant 0 : index
    %4 = vector.load %arg3[%c0_3, %c0_4] : memref<1x32xf32, #tpu.memory_space<vmem>>, vector<1x32xf32>
    %5 = vector.broadcast %4 : vector<1x32xf32> to vector<32x32xf32>
    %6 = arith.addf %3, %5 : vector<32x32xf32>
    %c0_5 = arith.constant 0 : index
    %c0_6 = arith.constant 0 : index
    %7 = vector.load %arg4[%c0_5, %c0_6] : memref<32x32xf32, #tpu.memory_space<vmem>>, vector<32x32xf32>
    tpu.vector_store %arg4[%c0_5, %c0_6], %6 {strides = array<i32>} : memref<32x32xf32, #tpu.memory_space<vmem>>, vector<32x32xf32>,
    return
  }
  func.func @transform_0(%arg0: i32) -> (i32, i32) {
    %c0_i32 = arith.constant 0 : i32
    %c0_i32_0 = arith.constant 0 : i32
    return %arg0, %c0_i32 : i32, i32
  }
  func.func @transform_1(%arg0: i32) -> (i32, i32) {
    %c0_i32 = arith.constant 0 : i32
    %c0_i32_0 = arith.constant 0 : i32
    %c0_i32_1 = arith.constant 0 : i32
    return %c0_i32, %c0_i32_0 : i32, i32
  }
  func.func @transform_2(%arg0: i32) -> (i32, i32) {
    %c0_i32 = arith.constant 0 : i32
    %c0_i32_0 = arith.constant 0 : i32
    %c0_i32_1 = arith.constant 0 : i32
    return %c0_i32, %c0_i32_0 : i32, i32
  }
  func.func @transform_3(%arg0: i32) -> (i32, i32) {
    %c0_i32 = arith.constant 0 : i32
    %c0_i32_0 = arith.constant 0 : i32
    return %arg0, %c0_i32 : i32, i32
  }
}

</mosaic_0001>

<llo_original>
// kernel: tpu_custom_call.1
$region0: #{tpu_custom_call.1}
  #allocation0 [shape = 'u32[]', space=smem, size = 0x4, offset = 0x4, fixed_abs, tag = 'smem constant byte address 0x4 - core index']
  #allocation1 [shape = 'u32[144,128]{1,0:T(1,128)}', space=vmem, size = 0x12000, scoped, tag = 'internal scratch']
  %s0 = inlined_call_operand.vmem [shape: f32[64,3], index: 0, kind: input, shape index: {}]
  %s1 = inlined_call_operand.vmem [shape: bf16[3,32], index: 1, kind: input, shape index: {}]
  %s2 = inlined_call_operand.vmem [shape: f32[1,32], index: 2, kind: input, shape index: {}]
  %s3 = inlined_call_operand.vmem [shape: f32[64,32], index: 3, kind: output, shape index: {}]
  %s4 = sld [smem:[#allocation0]]
  $region45: #{tpu_custom_call.1} parent=0
    _
  %s6 = ssub.s32 1, %s4
  %s7 = scalar_select 0, %s6, %s4
  loop: start=0, step=1, limit=4
  $region2: #{tpu_custom_call.1} parent=0 // loop_pre_header
    _
  $region3: #{tpu_custom_call.1} parent=0 // loop_header
    %s9 = sphi 0, %s13
    %p10 = scmp.ge.s32.totalorder %s9, 4
    %s19 = sphi 0, %s21
    %s22 = sphi 0, %s19
    %s23 = sphi 0, %s22
    %s39 = sphi 0, %s23
    %s43 = sphi 0, %s43
    %s45 = sphi 0, %s43
    %s46 = sphi 0, %s45
    %s60 = sphi 0, %s46
    %s64 = sphi 0, %s64
    %s66 = sphi 0, %s64
    %s67 = sphi 0, %s66
    %s81 = sphi 0, %s67
    %s87 = sphi 0, %s89
    %s90 = sphi 0, %s87
    %s91 = sphi 0, %s90
    %s107 = sphi 0, %s91
  $region4: #{tpu_custom_call.1} parent=0 // loop_header_branch
    %12 = sbr.rel (%p10) target = $region8
  $region5: #{tpu_custom_call.1} parent=0 // loop_body
    %s14 = ssub.s32 %s9, 1
    %s15 = ssub.s32 %s9, 2
    %s16 = sadd.s32 %s9, 1
    %s17 = ssub.s32 %s9, %s16
    %p18 = scmp.eq.s32.totalorder %s17, 0
    %s20 = sadd.s32 %s19, 1
    %s21 = scalar_select %p18, %s19, %s20
    %p24 = pneg %p18
    %p25 = scmp.eq.s32.totalorder %s9, 1
    %p26 = por %p24, %p25
    %p27 = scmp.ne.s32.totalorder %s19, %s22
    %p28 = scmp.eq.s32.totalorder %s9, 0
    %p29 = por %p27, %p28
    %p30 = scmp.ne.s32.totalorder %s19, %s22
    %p31 = scmp.eq.s32.totalorder %s14, 1
    %p32 = por %p30, %p31
    %p33 = scmp.ne.s32.totalorder %s22, %s23
    %p34 = scmp.eq.s32.totalorder %s14, 0
    %p35 = por %p33, %p34
    %p36 = scmp.ne.s32.totalorder %s22, %s23
    %p37 = scmp.eq.s32.totalorder %s15, 1
    %p38 = por %p36, %p37
    %p40 = scmp.ne.s32.totalorder %s23, %s39
    %p41 = scmp.eq.s32.totalorder %s15, 0
    %p42 = por %p40, %p41
    %s44 = sadd.s32 %s43, 1
    %p47 = scmp.eq.s32.totalorder %s9, 1
    %p48 = scmp.ne.s32.totalorder %s43, %s45
    %p49 = scmp.eq.s32.totalorder %s9, 0
    %p50 = por %p48, %p49
    %p51 = scmp.ne.s32.totalorder %s43, %s45
    %p52 = scmp.eq.s32.totalorder %s14, 1
    %p53 = por %p51, %p52
    %p54 = scmp.ne.s32.totalorder %s45, %s46
    %p55 = scmp.eq.s32.totalorder %s14, 0
    %p56 = por %p54, %p55
    %p57 = scmp.ne.s32.totalorder %s45, %s46
    %p58 = scmp.eq.s32.totalorder %s15, 1
    %p59 = por %p57, %p58
    %p61 = scmp.ne.s32.totalorder %s46, %s60
    %p62 = scmp.eq.s32.totalorder %s15, 0
    %p63 = por %p61, %p62
    %s65 = sadd.s32 %s64, 1
    %p68 = scmp.eq.s32.totalorder %s9, 1
    %p69 = scmp.ne.s32.totalorder %s64, %s66
    %p70 = scmp.eq.s32.totalorder %s9, 0
    %p71 = por %p69, %p70
    %p72 = scmp.ne.s32.totalorder %s64, %s66
    %p73 = scmp.eq.s32.totalorder %s14, 1
    %p74 = por %p72, %p73
    %p75 = scmp.ne.s32.totalorder %s66, %s67
    %p76 = scmp.eq.s32.totalorder %s14, 0
    %p77 = por %p75, %p76
    %p78 = scmp.ne.s32.totalorder %s66, %s67
    %p79 = scmp.eq.s32.totalorder %s15, 1
    %p80 = por %p78, %p79
    %p82 = scmp.ne.s32.totalorder %s67, %s81
    %p83 = scmp.eq.s32.totalorder %s15, 0
    %p84 = por %p82, %p83
    %s85 = ssub.s32 %s9, %s16
    %p86 = scmp.eq.s32.totalorder %s85, 0
    %s88 = sadd.s32 %s87, 1
    %s89 = scalar_select %p86, %s87, %s88
    %p92 = pneg %p86
    %p93 = scmp.eq.s32.totalorder %s9, 1
    %p94 = por %p92, %p93
    %p95 = scmp.ne.s32.totalorder %s87, %s90
    %p96 = scmp.eq.s32.totalorder %s9, 0
    %p97 = por %p95, %p96
    %p98 = scmp.ne.s32.totalorder %s87, %s90
    %p99 = scmp.eq.s32.totalorder %s14, 1
    %p100 = por %p98, %p99
    %p101 = scmp.ne.s32.totalorder %s90, %s91
    %p102 = scmp.eq.s32.totalorder %s14, 0
    %p103 = por %p101, %p102
    %p104 = scmp.ne.s32.totalorder %s90, %s91
    %p105 = scmp.eq.s32.totalorder %s15, 1
    %p106 = por %p104, %p105
    %p108 = scmp.ne.s32.totalorder %s91, %s107
    %p109 = scmp.eq.s32.totalorder %s15, 0
    %p110 = por %p108, %p109
    %p111 = scmp.le.s32.totalorder 1, %s9
    %p112 = scmp.lt.s32.totalorder %s9, 3
    %p113 = pnand %p111, %p112
    %p114 = pneg %p113
    // Predicated region
    $region9: #{tpu_custom_call.1} parent=5 // pred_check
      _
    $region10: #{tpu_custom_call.1} parent=5 // pred_check_branch
      %116 = sbr.rel (%p113) target = $region12
    $region11: #{tpu_custom_call.1} parent=5 // pred_region
      %s117 = ssub.s32 %s9, 1
      // Predicated region
      $region13: #{tpu_custom_call.1} parent=11 // pred_check
        %p118 = pneg %p56
      $region14: #{tpu_custom_call.1} parent=11 // pred_check_branch
        %120 = sbr.rel (%p118) target = $region16
      $region15: #{tpu_custom_call.1} parent=11 // pred_region
        _
      $region16: #{tpu_custom_call.1} parent=11 // pred_fallthru
        _
      // Predicated region
      $region17: #{tpu_custom_call.1} parent=11 // pred_check
        %p121 = pneg %p77
      $region18: #{tpu_custom_call.1} parent=11 // pred_check_branch
        %123 = sbr.rel (%p121) target = $region20
      $region19: #{tpu_custom_call.1} parent=11 // pred_region
        _
      $region20: #{tpu_custom_call.1} parent=11 // pred_fallthru
        _
    $region12: #{tpu_custom_call.1} parent=5 // pred_fallthru
      _
    %p124 = scmp.lt.s32.totalorder %s9, 2
    // Predicated region
    $region21: #{tpu_custom_call.1} parent=5 // pred_check
      %p125 = pneg %p124
    $region22: #{tpu_custom_call.1} parent=5 // pred_check_branch
      %127 = sbr.rel (%p125) target = $region24
    $region23: #{tpu_custom_call.1} parent=5 // pred_region
      // Predicated region
      $region25: #{tpu_custom_call.1} parent=23 // pred_check
        %p128 = pneg %p29
      $region26: #{tpu_custom_call.1} parent=23 // pred_check_branch
        %130 = sbr.rel (%p128) target = $region28
      $region27: #{tpu_custom_call.1} parent=23 // pred_region
        %s131 = smul.u32 4, %s9
        %p132 = scmp.lt.s32.totalorder %s131, 7
        %s133 = scalar_select %p132, %s131, 7
        %s134 = smul.addr %s133, 8
        %s135 = scalar_lea.vmem %s0, %s134
        %s136 = smul.u32 4, %s9
      $region28: #{tpu_custom_call.1} parent=23 // pred_fallthru
        _
    $region24: #{tpu_custom_call.1} parent=5 // pred_fallthru
      _
    %p137 = scmp.le.s32.totalorder 1, %s9
    %p138 = scmp.lt.s32.totalorder %s9, 3
    %p139 = pnand %p137, %p138
    %p140 = pneg %p139
    // Predicated region
    $region29: #{tpu_custom_call.1} parent=5 // pred_check
      _
    $region30: #{tpu_custom_call.1} parent=5 // pred_check_branch
      %142 = sbr.rel (%p139) target = $region32
    $region31: #{tpu_custom_call.1} parent=5 // pred_region
      %s143 = ssub.s32 %s9, 1
      %s144 = smul.u32 4, %s14
      %p145 = scmp.lt.s32.totalorder %s144, 7
      %s146 = scalar_select %p145, %s144, 7
      %s147 = smul.addr %s146, 8
      %s148 = scalar_lea.vmem %s0, %s147
      %p149 = pneg %p35
      %p150 = pneg %p32
      %p151 = pneg %p56
      %p152 = pneg %p53
      %p153 = pneg %p77
      %p154 = pneg %p74
      %p155 = pneg %p103
      %p156 = pneg %p100
      %s157 = smul.u32 4, %s14
      %p158 = scmp.lt.s32.totalorder %s157, 7
      %s159 = scalar_select %p158, %s157, 7
      %s160 = smul.addr %s159, 8
      %s161 = scalar_lea.vmem %s3, %s160
      %s162 = smul.u32 4, %s14
      %p163 = scmp.lt.s32.totalorder %s162, 7
      %s164 = scalar_select %p163, %s162, 7
      %s165 = smul.addr %s164, 8
      %s166 = scalar_lea.vmem %s0, %s165
      %s167 = smul.u32 4, %s14
      %s168 = smul.u32 4, %s14
      %p169 = scmp.lt.s32.totalorder %s168, 7
      %s170 = scalar_select %p169, %s168, 7
      %s171 = smul.addr %s170, 8
      %s172 = scalar_lea.vmem %s3, %s171
      %s173 = smul.u32 4, %s14
      %v175 = vld [vmem:[%s166] sm:$0xff]
      %v176 = vld [vmem:[%s166 + $0x8] sm:$0xff]
      %v177 = vld [vmem:[%s166 + $0x10] sm:$0xff]
      %v178 = vld [vmem:[%s166 + $0x18] sm:$0xff]
      %v179 = vpack.c.bf16 %v176, %v175
      %v180 = vpack.c.bf16 %v178, %v177
      %v181 = vld [vmem:[%s1] sm:$0x3]
      %v182 = vld [vmem:[%s2] sm:$0x1]
      %v184 = vlaneseq
      %v185 = vshrl.u32 %v184, 7
      %v186 = vsub.s32 0, %v185
      %v187 = vrot.slane %v182, %v186
      %vm189 = vcmask 23552
      %v191 = vsel %vm189, %v179, 0
      %v194 = vsel %vm189, %v180, 0
      %vm196 = vcmask 1040384
      %vm197 = vcmask 1041408
      %v198 = vsel %vm196, 4294967295, 65535
      %v199 = vsel %vm197, %v198, 0
      %v201 = vand.u32 %v181, %v199
      %203 = vmatprep.subr.bf16.mxu0 0
      %204 = vmatpush1.bf16.msra.mxu0 0
      %205 = vmatprep.subr.bf16.mxu0 0
      %206 = vmatpush1.bf16.msra.mxu0 0
      %207 = vmatprep.subr.bf16.mxu0 0
      %208 = vmatpush1.bf16.msra.mxu0 0
      %209 = vmatprep.subr.bf16.mxu0 0
      %210 = vmatpush1.bf16.msra.mxu0 0
      %211 = vmatprep.subr.bf16.mxu0 0
      %212 = vmatpush1.bf16.msra.mxu0 0
      %213 = vmatprep.subr.bf16.mxu0 0
      %214 = vmatpush1.bf16.msra.mxu0 0
      %215 = vmatprep.subr.bf16.mxu0 0
      %216 = vmatpush1.bf16.msra.mxu0 0
      %217 = vmatprep.subr.bf16.mxu0 0
      %218 = vmatpush1.bf16.msra.mxu0 %v201
      %219 = vmatprep.subr.bf16.mxu0 0
      %220 = vmatpush2.bf16.msra.mxu0 0
      %221 = vmatprep.subr.bf16.mxu0 0
      %222 = vmatpush2.bf16.msra.mxu0 0
      %223 = vmatprep.subr.bf16.mxu0 0
      %224 = vmatpush2.bf16.msra.mxu0 0
      %225 = vmatprep.subr.bf16.mxu0 0
      %226 = vmatpush2.bf16.msra.mxu0 0
      %227 = vmatprep.subr.bf16.mxu0 0
      %228 = vmatpush2.bf16.msra.mxu0 0
      %229 = vmatprep.subr.bf16.mxu0 0
      %230 = vmatpush2.bf16.msra.mxu0 0
      %231 = vmatprep.subr.bf16.mxu0 0
      %232 = vmatpush2.bf16.msra.mxu0 0
      %233 = vmatprep.subr.bf16.mxu0 0
      %234 = vmatpush2.bf16.msra.mxu0 0
      %235 = vmatprep.mubr.bf16.mxu0 0
      %236 = vmatmul.mubr.bf16.gmra.mxu0 %v191
      %v237 = vpop.f32.mrf.mxu0
      %v238 = vadd.f32 %v187, %v237
      %v239 = vpop.f32.mrf.mxu0
      %v240 = vpop.f32.mrf.mxu0
      %v241 = vadd.f32 %v187, %v240
      %v242 = vpop.f32.mrf.mxu0
      %243 = vmatprep.mubr.bf16.mxu0 0
      %244 = vmatmul.mubr.bf16.gmra.mxu0 %v194
      %v245 = vpop.f32.mrf.mxu0
      %v246 = vadd.f32 %v187, %v245
      %v247 = vpop.f32.mrf.mxu0
      %v248 = vpop.f32.mrf.mxu0
      %v249 = vadd.f32 %v187, %v248
      %v250 = vpop.f32.mrf.mxu0
      %251 = vdwg.mxu0
      %vm252 = vcmask 261120
      %253 = vst.msk [vmem:[%s172] sm:$0xff] %vm252, %v238
      %254 = vst.msk [vmem:[%s172 + $0x8] sm:$0xff] %vm252, %v241
      %255 = vst.msk [vmem:[%s172 + $0x10] sm:$0xff] %vm252, %v246
      %256 = vst.msk [vmem:[%s172 + $0x18] sm:$0xff] %vm252, %v249
      %s257 = smul.u32 4, %s14
      %p258 = scmp.lt.s32.totalorder %s257, 7
      %s259 = scalar_select %p258, %s257, 7
      %s260 = smul.addr %s259, 8
      %s261 = scalar_lea.vmem %s3, %s260
      // Predicated region
      $region33: #{tpu_custom_call.1} parent=31 // pred_check
        %p262 = pneg %p100
      $region34: #{tpu_custom_call.1} parent=31 // pred_check_branch
        %264 = sbr.rel (%p262) target = $region36
      $region35: #{tpu_custom_call.1} parent=31 // pred_region
        %s265 = smul.u32 4, %s14
      $region36: #{tpu_custom_call.1} parent=31 // pred_fallthru
        _
    $region32: #{tpu_custom_call.1} parent=5 // pred_fallthru
      _
    %p266 = scmp.le.s32.totalorder 2, %s9
    // Predicated region
    $region37: #{tpu_custom_call.1} parent=5 // pred_check
      %p267 = pneg %p266
    $region38: #{tpu_custom_call.1} parent=5 // pred_check_branch
      %269 = sbr.rel (%p267) target = $region40
    $region39: #{tpu_custom_call.1} parent=5 // pred_region
      %s270 = ssub.s32 %s9, 2
      // Predicated region
      $region41: #{tpu_custom_call.1} parent=39 // pred_check
        %p271 = pneg %p106
      $region42: #{tpu_custom_call.1} parent=39 // pred_check_branch
        %273 = sbr.rel (%p271) target = $region44
      $region43: #{tpu_custom_call.1} parent=39 // pred_region
        %s274 = smul.u32 4, %s15
        %p275 = scmp.lt.s32.totalorder %s274, 7
        %s276 = scalar_select %p275, %s274, 7
        %s277 = smul.addr %s276, 8
        %s278 = scalar_lea.vmem %s3, %s277
      $region44: #{tpu_custom_call.1} parent=39 // pred_fallthru
        _
    $region40: #{tpu_custom_call.1} parent=5 // pred_fallthru
      _
  $region6: #{tpu_custom_call.1} parent=0 // loop_footer
    %s13 = sadd.s32 1, %s9
  $region7: #{tpu_custom_call.1} parent=0 // loop_footer_branch
    %8 = sbr.rel target = $region3
  $region8: #{tpu_custom_call.1} parent=0 // loop_exit
    _

</llo_original>
